<compile_context>
chip_gen: v7x
topology: tpu7x:2x2x1
jax: 0.10.0
libtpu: 0.0.40
codegen_flags: <defaults>
</compile_context>

<pallas_src>
import functools

import jax
import jax.numpy as jnp
from jax.experimental import pallas as pl
from jax.experimental.pallas import tpu as pltpu

IN_FEATURES = 28 * 28      # 784
IN_PAD = 896               # 7 * 128 : lane-dense K for the first matmul
OUT_CLASSES = 10
OUT_PAD = 128              # lane-dense output block; sliced back in the wrapper
NEG_FILL = -1e30           # bias for padded logit columns -> exp() == 0


def _round_up(x, m):
    return (x + m - 1) // m * m


def mlp_softmax_kernel(x_ref,
                       w1_ref, b1_ref,
                       w2_ref, b2_ref,
                       w3_ref, b3_ref,
                       w4_ref, b4_ref,
                       o_ref):
    x = x_ref[...]                                                     # (TB, 896) bf16

    h = jnp.dot(x, w1_ref[...], preferred_element_type=jnp.float32) + b1_ref[...]
    h = jnp.maximum(h, 0.0).astype(jnp.bfloat16)                       # (TB, 256)

    h = jnp.dot(h, w2_ref[...], preferred_element_type=jnp.float32) + b2_ref[...]
    h = jnp.maximum(h, 0.0).astype(jnp.bfloat16)                       # (TB, 128)

    h = jnp.dot(h, w3_ref[...], preferred_element_type=jnp.float32) + b3_ref[...]
    h = jnp.maximum(h, 0.0).astype(jnp.bfloat16)                       # (TB, 64)

    logits = jnp.dot(h, w4_ref[...], preferred_element_type=jnp.float32) + b4_ref[...]
    # (TB, 128); columns >= 10 carry a -1e30 bias -> contribute 0 to the softmax.

    # numerically stable softmax along dim=1, divide on the EUP slot
    m = jnp.max(logits, axis=1, keepdims=True)
    e = jnp.exp(logits - m)
    s = jnp.sum(e, axis=1, keepdims=True)
    o_ref[...] = e * pl.reciprocal(s, approx=True)


def prepare_params(params):
    """Cast weights to bf16, pad w1 rows to 896 and w4/b4 columns to 128."""
    w1, b1, w2, b2, w3, b3, w4, b4 = params
    w1p = (jnp.zeros((IN_PAD, 256), jnp.bfloat16)
           .at[:IN_FEATURES, :].set(w1.astype(jnp.bfloat16)))
    w4p = (jnp.zeros((64, OUT_PAD), jnp.bfloat16)
           .at[:, :OUT_CLASSES].set(w4.astype(jnp.bfloat16)))
    b4p = (jnp.full((1, OUT_PAD), NEG_FILL, jnp.float32)
           .at[:, :OUT_CLASSES].set(b4.astype(jnp.float32)))
    return (w1p, b1.astype(jnp.float32),
            w2.astype(jnp.bfloat16), b2.astype(jnp.float32),
            w3.astype(jnp.bfloat16), b3.astype(jnp.float32),
            w4p, b4p)


@jax.jit
def my_module_forward(x, packed_params):
    """x: (B, 1, 28, 28) float32 (NCHW). Returns (B, 10) softmax probs."""
    B = x.shape[0]
    TB = min(256, _round_up(B, 8))          # fill the MXU M dim for large batch
    B_pad = _round_up(B, TB)
    n_tiles = B_pad // TB

    x_flat = x.reshape(B, IN_FEATURES).astype(jnp.bfloat16)
    x_flat = jnp.pad(x_flat, ((0, B_pad - B), (0, IN_PAD - IN_FEATURES)))

    # x / output are tiled over the batch grid; weights & biases stay resident.
    x_spec = pl.BlockSpec((TB, IN_PAD), lambda i: (i, 0))
    weight_specs = [pl.BlockSpec(p.shape, lambda i: (0, 0)) for p in packed_params]
    out_spec = pl.BlockSpec((TB, OUT_PAD), lambda i: (i, 0))

    weight_bytes = sum(int(p.size) * p.dtype.itemsize for p in packed_params)
    cost = pl.CostEstimate(
        flops=2 * B_pad * (IN_PAD * 256 + 256 * 128 + 128 * 64 + 64 * OUT_PAD),
        transcendentals=B_pad * OUT_PAD,
        bytes_accessed=weight_bytes + B_pad * (IN_PAD * 2 + OUT_PAD * 4),
    )

    out_padded = pl.pallas_call(
        mlp_softmax_kernel,
        out_shape=jax.ShapeDtypeStruct((B_pad, OUT_PAD), jnp.float32),
        grid_spec=pltpu.PrefetchScalarGridSpec(
            num_scalar_prefetch=0,
            grid=(n_tiles,),
            in_specs=[x_spec] + weight_specs,
            out_specs=out_spec,
        ),
        compiler_params=pltpu.CompilerParams(
            dimension_semantics=("parallel",),   # v7x: shard batch over both TCs
            vmem_limit_bytes=64 << 20,
        ),
        cost_estimate=cost,
    )(x_flat, *packed_params)

    return out_padded[:B, :OUT_CLASSES]


def init_params(key):
    """Deterministic init mimicking nn.Linear's uniform(-1/sqrt(fan_in), ...)."""
    dims = [(IN_FEATURES, 256), (256, 128), (128, 64), (64, OUT_CLASSES)]
    params = []
    for fan_in, fan_out in dims:
        kw, kb, key = jax.random.split(key, 3)
        bound = 1.0 / jnp.sqrt(fan_in)
        w = jax.random.uniform(kw, (fan_in, fan_out), jnp.float32, -bound, bound)
        b = jax.random.uniform(kb, (1, fan_out), jnp.float32, -bound, bound)
        params.extend([w, b])
    return tuple(params)


def reference_forward(x, params):
    """Pure-JAX f32 reference matching the PyTorch module."""
    w1, b1, w2, b2, w3, b3, w4, b4 = params
    h = x.reshape(x.shape[0], -1)
    h = jnp.maximum(h @ w1 + b1, 0.0)
    h = jnp.maximum(h @ w2 + b2, 0.0)
    h = jnp.maximum(h @ w3 + b3, 0.0)
    logits = h @ w4 + b4
    return jax.nn.softmax(logits, axis=1)


if __name__ == "__main__":
    key = jax.random.PRNGKey(0)
    k_x, k_p = jax.random.split(key)

    B = 8
    x = jax.random.normal(k_x, (B, 1, 28, 28), dtype=jnp.float32)   # NCHW input
    params = init_params(k_p)
    packed = prepare_params(params)

    out = my_module_forward(x, packed)
    out = jax.block_until_ready(out)

    assert out.shape == (B, OUT_CLASSES)
    # softmax rows sum to 1 (approx reciprocal => loose tolerance)
    assert jnp.allclose(jnp.sum(out, axis=1), 1.0, atol=1e-2)
    # matches the f32 reference within bf16 matmul tolerance
    ref = reference_forward(x, params)
    assert jnp.allclose(out, ref, atol=5e-2)
    print("KERNEL_OK")
</pallas_src>

<mosaic_0001>
module attributes {stable_mosaic.version = 11 : i64} {
  func.func @mlp_softmax_kernel(%arg0: i32, %arg1: memref<8x896xbf16, #tpu.memory_space<vmem>>, %arg2: memref<896x256xbf16, #tpu.memory_space<vmem>>, %arg3: memref<1x256xf32, #tpu.memory_space<vmem>>, %arg4: memref<256x128xbf16, #tpu.memory_space<vmem>>, %arg5: memref<1x128xf32, #tpu.memory_space<vmem>>, %arg6: memref<128x64xbf16, #tpu.memory_space<vmem>>, %arg7: memref<1x64xf32, #tpu.memory_space<vmem>>, %arg8: memref<64x128xbf16, #tpu.memory_space<vmem>>, %arg9: memref<1x128xf32, #tpu.memory_space<vmem>>, %arg10: memref<8x128xf32, #tpu.memory_space<vmem>>) attributes {dimension_semantics = [#tpu.dimension_semantics<parallel>], iteration_bounds = array<i64: 1>, scalar_prefetch = 0 : i64, scratch_operands = 0 : i64, tpu.core_type = #tpu.core_type<tc>, window_params = [{transform_indices = @transform_0, window_bounds = array<i64: 8, 896>}, {pipeline_mode = #tpu.pipeline_mode<synchronous>, transform_indices = @transform_1, window_bounds = array<i64: 896, 256>}, {pipeline_mode = #tpu.pipeline_mode<synchronous>, transform_indices = @transform_2, window_bounds = array<i64: 1, 256>}, {pipeline_mode = #tpu.pipeline_mode<synchronous>, transform_indices = @transform_3, window_bounds = array<i64: 256, 128>}, {pipeline_mode = #tpu.pipeline_mode<synchronous>, transform_indices = @transform_4, window_bounds = array<i64: 1, 128>}, {pipeline_mode = #tpu.pipeline_mode<synchronous>, transform_indices = @transform_5, window_bounds = array<i64: 128, 64>}, {pipeline_mode = #tpu.pipeline_mode<synchronous>, transform_indices = @transform_6, window_bounds = array<i64: 1, 64>}, {pipeline_mode = #tpu.pipeline_mode<synchronous>, transform_indices = @transform_7, window_bounds = array<i64: 64, 128>}, {pipeline_mode = #tpu.pipeline_mode<synchronous>, transform_indices = @transform_8, window_bounds = array<i64: 1, 128>}, {transform_indices = @transform_9, window_bounds = array<i64: 8, 128>}]} {
    %c0 = arith.constant 0 : index
    %c0_0 = arith.constant 0 : index
    %0 = vector.load %arg1[%c0, %c0_0] : memref<8x896xbf16, #tpu.memory_space<vmem>>, vector<8x896xbf16>
    %c0_1 = arith.constant 0 : index
    %c0_2 = arith.constant 0 : index
    %1 = vector.load %arg2[%c0_1, %c0_2] : memref<896x256xbf16, #tpu.memory_space<vmem>>, vector<896x256xbf16>
    %cst = arith.constant dense<0.000000e+00> : vector<8x256xf32>
    %2 = tpu.matmul %0, %1, %cst {dimension_numbers = #tpu.dot_dimension_numbers<[1], [0], [0], [1], [0, 0, 1, 1], [], []>} : vector<8x896xbf16>, vector<896x256xbf16>, vector<8x256xf32> -> vector<8x256xf32>
    %c0_3 = arith.constant 0 : index
    %c0_4 = arith.constant 0 : index
    %3 = vector.load %arg3[%c0_3, %c0_4] : memref<1x256xf32, #tpu.memory_space<vmem>>, vector<1x256xf32>
    %4 = vector.broadcast %3 : vector<1x256xf32> to vector<8x256xf32>
    %5 = arith.addf %2, %4 : vector<8x256xf32>
    %cst_5 = arith.constant 0.000000e+00 : f32
    %6 = vector.broadcast %cst_5 : f32 to vector<8x256xf32>
    %7 = arith.maximumf %5, %6 : vector<8x256xf32>
    %8 = arith.truncf %7 : vector<8x256xf32> to vector<8x256xbf16>
    %c0_6 = arith.constant 0 : index
    %c0_7 = arith.constant 0 : index
    %9 = vector.load %arg4[%c0_6, %c0_7] : memref<256x128xbf16, #tpu.memory_space<vmem>>, vector<256x128xbf16>
    %cst_8 = arith.constant dense<0.000000e+00> : vector<8x128xf32>
    %10 = tpu.matmul %8, %9, %cst_8 {dimension_numbers = #tpu.dot_dimension_numbers<[1], [0], [0], [1], [0, 0, 1, 1], [], []>} : vector<8x256xbf16>, vector<256x128xbf16>, vector<8x128xf32> -> vector<8x128xf32>
    %c0_9 = arith.constant 0 : index
    %c0_10 = arith.constant 0 : index
    %11 = vector.load %arg5[%c0_9, %c0_10] : memref<1x128xf32, #tpu.memory_space<vmem>>, vector<1x128xf32>
    %12 = vector.broadcast %11 : vector<1x128xf32> to vector<8x128xf32>
    %13 = arith.addf %10, %12 : vector<8x128xf32>
    %cst_11 = arith.constant 0.000000e+00 : f32
    %14 = vector.broadcast %cst_11 : f32 to vector<8x128xf32>
    %15 = arith.maximumf %13, %14 : vector<8x128xf32>
    %16 = arith.truncf %15 : vector<8x128xf32> to vector<8x128xbf16>
    %c0_12 = arith.constant 0 : index
    %c0_13 = arith.constant 0 : index
    %17 = vector.load %arg6[%c0_12, %c0_13] : memref<128x64xbf16, #tpu.memory_space<vmem>>, vector<128x64xbf16>
    %cst_14 = arith.constant dense<0.000000e+00> : vector<8x64xf32>
    %18 = tpu.matmul %16, %17, %cst_14 {dimension_numbers = #tpu.dot_dimension_numbers<[1], [0], [0], [1], [0, 0, 1, 1], [], []>} : vector<8x128xbf16>, vector<128x64xbf16>, vector<8x64xf32> -> vector<8x64xf32>
    %c0_15 = arith.constant 0 : index
    %c0_16 = arith.constant 0 : index
    %19 = vector.load %arg7[%c0_15, %c0_16] : memref<1x64xf32, #tpu.memory_space<vmem>>, vector<1x64xf32>
    %20 = vector.broadcast %19 : vector<1x64xf32> to vector<8x64xf32>
    %21 = arith.addf %18, %20 : vector<8x64xf32>
    %cst_17 = arith.constant 0.000000e+00 : f32
    %22 = vector.broadcast %cst_17 : f32 to vector<8x64xf32>
    %23 = arith.maximumf %21, %22 : vector<8x64xf32>
    %24 = arith.truncf %23 : vector<8x64xf32> to vector<8x64xbf16>
    %c0_18 = arith.constant 0 : index
    %c0_19 = arith.constant 0 : index
    %25 = vector.load %arg8[%c0_18, %c0_19] : memref<64x128xbf16, #tpu.memory_space<vmem>>, vector<64x128xbf16>
    %cst_20 = arith.constant dense<0.000000e+00> : vector<8x128xf32>
    %26 = tpu.matmul %24, %25, %cst_20 {dimension_numbers = #tpu.dot_dimension_numbers<[1], [0], [0], [1], [0, 0, 1, 1], [], []>} : vector<8x64xbf16>, vector<64x128xbf16>, vector<8x128xf32> -> vector<8x128xf32>
    %c0_21 = arith.constant 0 : index
    %c0_22 = arith.constant 0 : index
    %27 = vector.load %arg9[%c0_21, %c0_22] : memref<1x128xf32, #tpu.memory_space<vmem>>, vector<1x128xf32>
    %28 = vector.broadcast %27 : vector<1x128xf32> to vector<8x128xf32>
    %29 = arith.addf %26, %28 : vector<8x128xf32>
    %cst_23 = arith.constant dense<0xFF800000> : vector<8xf32>
    %30 = vector.multi_reduction <maximumf>, %29, %cst_23 [1] : vector<8x128xf32> to vector<8xf32>
    %31 = vector.shape_cast %30 : vector<8xf32> to vector<8x1xf32>
    %32 = vector.broadcast %31 : vector<8x1xf32> to vector<8x128xf32>
    %33 = arith.subf %29, %32 : vector<8x128xf32>
    %34 = math.exp %33 : vector<8x128xf32>
    %cst_24 = arith.constant dense<0.000000e+00> : vector<8xf32>
    %35 = vector.multi_reduction <add>, %34, %cst_24 [1] : vector<8x128xf32> to vector<8xf32>
    %36 = vector.shape_cast %35 : vector<8xf32> to vector<8x1xf32>
    %37 = tpu.reciprocal %36 {approx = true} : vector<8x1xf32> -> vector<8x1xf32>
    %38 = vector.broadcast %37 : vector<8x1xf32> to vector<8x128xf32>
    %39 = arith.mulf %34, %38 : vector<8x128xf32>
    %c0_25 = arith.constant 0 : index
    %c0_26 = arith.constant 0 : index
    %40 = vector.load %arg10[%c0_25, %c0_26] : memref<8x128xf32, #tpu.memory_space<vmem>>, vector<8x128xf32>
    tpu.vector_store %arg10[%c0_25, %c0_26], %39 {strides = array<i32>} : memref<8x128xf32, #tpu.memory_space<vmem>>, vector<8x128xf32>,
    return
  }
  func.func @transform_0(%arg0: i32) -> (i32, i32) {
    %c0_i32 = arith.constant 0 : i32
    %c0_i32_0 = arith.constant 0 : i32
    return %arg0, %c0_i32 : i32, i32
  }
  func.func @transform_1(%arg0: i32) -> (i32, i32) {
    %c0_i32 = arith.constant 0 : i32
    %c0_i32_0 = arith.constant 0 : i32
    %c0_i32_1 = arith.constant 0 : i32
    return %c0_i32, %c0_i32_0 : i32, i32
  }
  func.func @transform_2(%arg0: i32) -> (i32, i32) {
    %c0_i32 = arith.constant 0 : i32
    %c0_i32_0 = arith.constant 0 : i32
    %c0_i32_1 = arith.constant 0 : i32
    return %c0_i32, %c0_i32_0 : i32, i32
  }
  func.func @transform_3(%arg0: i32) -> (i32, i32) {
    %c0_i32 = arith.constant 0 : i32
    %c0_i32_0 = arith.constant 0 : i32
    %c0_i32_1 = arith.constant 0 : i32
    return %c0_i32, %c0_i32_0 : i32, i32
  }
  func.func @transform_4(%arg0: i32) -> (i32, i32) {
    %c0_i32 = arith.constant 0 : i32
    %c0_i32_0 = arith.constant 0 : i32
    %c0_i32_1 = arith.constant 0 : i32
    return %c0_i32, %c0_i32_0 : i32, i32
  }
  func.func @transform_5(%arg0: i32) -> (i32, i32) {
    %c0_i32 = arith.constant 0 : i32
    %c0_i32_0 = arith.constant 0 : i32
    %c0_i32_1 = arith.constant 0 : i32
    return %c0_i32, %c0_i32_0 : i32, i32
  }
  func.func @transform_6(%arg0: i32) -> (i32, i32) {
    %c0_i32 = arith.constant 0 : i32
    %c0_i32_0 = arith.constant 0 : i32
    %c0_i32_1 = arith.constant 0 : i32
    return %c0_i32, %c0_i32_0 : i32, i32
  }
  func.func @transform_7(%arg0: i32) -> (i32, i32) {
    %c0_i32 = arith.constant 0 : i32
    %c0_i32_0 = arith.constant 0 : i32
    %c0_i32_1 = arith.constant 0 : i32
    return %c0_i32, %c0_i32_0 : i32, i32
  }
  func.func @transform_8(%arg0: i32) -> (i32, i32) {
    %c0_i32 = arith.constant 0 : i32
    %c0_i32_0 = arith.constant 0 : i32
    %c0_i32_1 = arith.constant 0 : i32
    return %c0_i32, %c0_i32_0 : i32, i32
  }
  func.func @transform_9(%arg0: i32) -> (i32, i32) {
    %c0_i32 = arith.constant 0 : i32
    %c0_i32_0 = arith.constant 0 : i32
    return %arg0, %c0_i32 : i32, i32
  }
}

</mosaic_0001>

<llo_original>
// kernel: my_module_forward.1
$region0: #{my_module_forward.1}
  #allocation0 [shape = 'u32[]', space=smem, size = 0x4, offset = 0x4, fixed_abs, tag = 'smem constant byte address 0x4 - core index']
  #allocation1 [shape = 'u32[144,128]{1,0:T(1,128)}', space=vmem, size = 0x12000, scoped, tag = 'internal scratch']
  %s0 = inlined_call_operand.hbm [shape: bf16[8,896], index: 0, kind: input, shape index: {}]
  %s1 = inlined_call_operand.hbm [shape: bf16[896,256], index: 1, kind: input, shape index: {}]
  %s2 = inlined_call_operand.hbm [shape: f32[1,256], index: 2, kind: input, shape index: {}]
  %s3 = inlined_call_operand.hbm [shape: bf16[256,128], index: 3, kind: input, shape index: {}]
  %s4 = inlined_call_operand.hbm [shape: f32[1,128], index: 4, kind: input, shape index: {}]
  %s5 = inlined_call_operand.hbm [shape: bf16[128,64], index: 5, kind: input, shape index: {}]
  %s6 = inlined_call_operand.hbm [shape: f32[1,64], index: 6, kind: input, shape index: {}]
  %s7 = inlined_call_operand.hbm [shape: bf16[64,128], index: 7, kind: input, shape index: {}]
  %s8 = inlined_call_operand.hbm [shape: f32[1,128], index: 8, kind: input, shape index: {}]
  %s9 = inlined_call_operand.hbm [shape: f32[8,128], index: 9, kind: output, shape index: {}]
  %s10 = sld [smem:[#allocation0]]
  $region82: #{my_module_forward.1} parent=0
    _
  %s12 = ssub.s32 1, %s10
  %s13 = scalar_select 0, %s12, %s10
  $region1: #{my_module_forward.1} parent=0
    #allocation2 [shape = 'u8[14336]{0}', space=vmem, size = 0x3800, scoped, tag = 'input window, operand 0, single buffered']
    #allocation3 [shape = 's32[1]{0}', space=sflag, size = 0x4, scoped, tag = 'scoped memory for my_module_forward.1']
    #allocation4 [shape = 's32[1]{0}', space=sflag, size = 0x4, scoped, tag = 'scoped memory for my_module_forward.1']
    #allocation5 [shape = 'u8[458752]{0}', space=vmem, size = 0x70000, scoped, tag = 'input window, operand 1, single buffered']
    #allocation6 [shape = 's32[1]{0}', space=sflag, size = 0x4, scoped, tag = 'scoped memory for my_module_forward.1']
    #allocation7 [shape = 'u8[1024]{0}', space=vmem, size = 0x400, scoped, tag = 'input window, operand 2, single buffered']
    #allocation8 [shape = 'u8[65536]{0}', space=vmem, size = 0x10000, scoped, tag = 'input window, operand 3, single buffered']
    #allocation9 [shape = 's32[1]{0}', space=sflag, size = 0x4, scoped, tag = 'scoped memory for my_module_forward.1']
    #allocation10 [shape = 'u8[512]{0}', space=vmem, size = 0x400, scoped, tag = 'input window, operand 4, single buffered']
    #allocation11 [shape = 'u8[32768]{0}', space=vmem, size = 0x8000, scoped, tag = 'input window, operand 5, single buffered']
    #allocation12 [shape = 's32[1]{0}', space=sflag, size = 0x4, scoped, tag = 'scoped memory for my_module_forward.1']
    #allocation13 [shape = 'u8[512]{0}', space=vmem, size = 0x400, scoped, tag = 'input window, operand 6, single buffered']
    #allocation14 [shape = 'u8[16384]{0}', space=vmem, size = 0x4000, scoped, tag = 'input window, operand 7, single buffered']
    #allocation15 [shape = 's32[1]{0}', space=sflag, size = 0x4, scoped, tag = 'scoped memory for my_module_forward.1']
    #allocation16 [shape = 'u8[512]{0}', space=vmem, size = 0x400, scoped, tag = 'input window, operand 8, single buffered']
    #allocation17 [shape = 'u8[4096]{0}', space=vmem, size = 0x1000, scoped, tag = 'output window, operand 0, single buffered']
    %14 = vsyncpa [#allocation3], 0
    %15 = vsyncpa [#allocation6], 0
    %16 = vsyncpa [#allocation9], 0
    %17 = vsyncpa [#allocation12], 0
    %18 = vsyncpa [#allocation15], 0
    %19 = vsyncpa [#allocation4], 0
    // Predicated region
    $region2: #{my_module_forward.1} parent=1 // pred_check
      _
    $region3: #{my_module_forward.1} parent=1 // pred_check_branch
      %21 = sbr.rel (0) target = $region5
    $region4: #{my_module_forward.1} parent=1 // pred_region
      %s23 = ssub.s32 448, 448
      %24 = vsyncadd [#allocation3], %s23
      %s26 = sshll.u32 [#allocation2], 4
      %s27 = int_to_ptr.vmem [resolvable:$true] %s26
      %29 = dma.hbm_to_vmem [thread:$0]  %s0, 448, %s27, [#allocation3]
    $region5: #{my_module_forward.1} parent=1 // pred_fallthru
      _
    // Predicated region
    $region6: #{my_module_forward.1} parent=1 // pred_check
      _
    $region7: #{my_module_forward.1} parent=1 // pred_check_branch
      %31 = sbr.rel (0) target = $region9
    $region8: #{my_module_forward.1} parent=1 // pred_region
      %s33 = ssub.s32 14336, 14336
      %34 = vsyncadd [#allocation6], %s33
      %s35 = sshll.u32 [#allocation5], 4
      %s36 = int_to_ptr.vmem [resolvable:$true] %s35
      %41 = dma.hbm_to_vmem [thread:$0]  %s1, 14336, %s36, [#allocation6], 128, 128, 8
    $region9: #{my_module_forward.1} parent=1 // pred_fallthru
      _
    // Predicated region
    $region10: #{my_module_forward.1} parent=1 // pred_check
      _
    $region11: #{my_module_forward.1} parent=1 // pred_check_branch
      %43 = sbr.rel (0) target = $region13
    $region12: #{my_module_forward.1} parent=1 // pred_region
      %s45 = ssub.s32 32, 32
      %46 = vsyncadd [#allocation6], %s45
      %s48 = sshll.u32 [#allocation7], 4
      %s49 = int_to_ptr.vmem [resolvable:$true] %s48
      %51 = dma.hbm_to_vmem [thread:$0]  %s2, 32, %s49, [#allocation6]
    $region13: #{my_module_forward.1} parent=1 // pred_fallthru
      _
    // Predicated region
    $region14: #{my_module_forward.1} parent=1 // pred_check
      _
    $region15: #{my_module_forward.1} parent=1 // pred_check_branch
      %53 = sbr.rel (0) target = $region17
    $region16: #{my_module_forward.1} parent=1 // pred_region
      %s55 = ssub.s32 2048, 2048
      %56 = vsyncadd [#allocation9], %s55
      %s57 = sshll.u32 [#allocation8], 4
      %s58 = int_to_ptr.vmem [resolvable:$true] %s57
      %63 = dma.hbm_to_vmem [thread:$0]  %s3, 2048, %s58, [#allocation9], 64, 64, 4
    $region17: #{my_module_forward.1} parent=1 // pred_fallthru
      _
    // Predicated region
    $region18: #{my_module_forward.1} parent=1 // pred_check
      _
    $region19: #{my_module_forward.1} parent=1 // pred_check_branch
      %65 = sbr.rel (0) target = $region21
    $region20: #{my_module_forward.1} parent=1 // pred_region
      %s67 = ssub.s32 16, 16
      %68 = vsyncadd [#allocation9], %s67
      %s70 = sshll.u32 [#allocation10], 4
      %s71 = int_to_ptr.vmem [resolvable:$true] %s70
      %73 = dma.hbm_to_vmem [thread:$0]  %s4, 16, %s71, [#allocation9]
    $region21: #{my_module_forward.1} parent=1 // pred_fallthru
      _
    // Predicated region
    $region22: #{my_module_forward.1} parent=1 // pred_check
      _
    $region23: #{my_module_forward.1} parent=1 // pred_check_branch
      %75 = sbr.rel (0) target = $region25
    $region24: #{my_module_forward.1} parent=1 // pred_region
      %s77 = ssub.s32 1024, 1024
      %78 = vsyncadd [#allocation12], %s77
      %s79 = sshll.u32 [#allocation11], 4
      %s80 = int_to_ptr.vmem [resolvable:$true] %s79
      %85 = dma.hbm_to_vmem [thread:$0]  %s5, 1024, %s80, [#allocation12], 64, 64, 4
    $region25: #{my_module_forward.1} parent=1 // pred_fallthru
      _
    // Predicated region
    $region26: #{my_module_forward.1} parent=1 // pred_check
      _
    $region27: #{my_module_forward.1} parent=1 // pred_check_branch
      %87 = sbr.rel (0) target = $region29
    $region28: #{my_module_forward.1} parent=1 // pred_region
      %s89 = ssub.s32 16, 16
      %90 = vsyncadd [#allocation12], %s89
      %s92 = sshll.u32 [#allocation13], 4
      %s93 = int_to_ptr.vmem [resolvable:$true] %s92
      %95 = dma.hbm_to_vmem [thread:$0]  %s6, 16, %s93, [#allocation12]
    $region29: #{my_module_forward.1} parent=1 // pred_fallthru
      _
    // Predicated region
    $region30: #{my_module_forward.1} parent=1 // pred_check
      _
    $region31: #{my_module_forward.1} parent=1 // pred_check_branch
      %97 = sbr.rel (0) target = $region33
    $region32: #{my_module_forward.1} parent=1 // pred_region
      %s99 = ssub.s32 512, 512
      %100 = vsyncadd [#allocation15], %s99
      %s101 = sshll.u32 [#allocation14], 4
      %s102 = int_to_ptr.vmem [resolvable:$true] %s101
      %107 = dma.hbm_to_vmem [thread:$0]  %s7, 512, %s102, [#allocation15], 64, 64, 4
    $region33: #{my_module_forward.1} parent=1 // pred_fallthru
      _
    // Predicated region
    $region34: #{my_module_forward.1} parent=1 // pred_check
      _
    $region35: #{my_module_forward.1} parent=1 // pred_check_branch
      %109 = sbr.rel (0) target = $region37
    $region36: #{my_module_forward.1} parent=1 // pred_region
      %s111 = ssub.s32 16, 16
      %112 = vsyncadd [#allocation15], %s111
      %s114 = sshll.u32 [#allocation16], 4
      %s115 = int_to_ptr.vmem [resolvable:$true] %s114
      %117 = dma.hbm_to_vmem [thread:$0]  %s8, 16, %s115, [#allocation15]
    $region37: #{my_module_forward.1} parent=1 // pred_fallthru
      _
    // Predicated region
    $region38: #{my_module_forward.1} parent=1 // pred_check
      _
    $region39: #{my_module_forward.1} parent=1 // pred_check_branch
      %119 = sbr.rel (0) target = $region41
    $region40: #{my_module_forward.1} parent=1 // pred_region
      %120 = dma.done [#allocation3], 448
    $region41: #{my_module_forward.1} parent=1 // pred_fallthru
      _
    // Predicated region
    $region42: #{my_module_forward.1} parent=1 // pred_check
      _
    $region43: #{my_module_forward.1} parent=1 // pred_check_branch
      %122 = sbr.rel (0) target = $region45
    $region44: #{my_module_forward.1} parent=1 // pred_region
      %123 = dma.done [#allocation6], 14336
    $region45: #{my_module_forward.1} parent=1 // pred_fallthru
      _
    // Predicated region
    $region46: #{my_module_forward.1} parent=1 // pred_check
      _
    $region47: #{my_module_forward.1} parent=1 // pred_check_branch
      %125 = sbr.rel (0) target = $region49
    $region48: #{my_module_forward.1} parent=1 // pred_region
      %126 = dma.done [#allocation6], 32
    $region49: #{my_module_forward.1} parent=1 // pred_fallthru
      _
    // Predicated region
    $region50: #{my_module_forward.1} parent=1 // pred_check
      _
    $region51: #{my_module_forward.1} parent=1 // pred_check_branch
      %128 = sbr.rel (0) target = $region53
    $region52: #{my_module_forward.1} parent=1 // pred_region
      %129 = dma.done [#allocation9], 2048
    $region53: #{my_module_forward.1} parent=1 // pred_fallthru
      _
    // Predicated region
    $region54: #{my_module_forward.1} parent=1 // pred_check
      _
    $region55: #{my_module_forward.1} parent=1 // pred_check_branch
      %131 = sbr.rel (0) target = $region57
    $region56: #{my_module_forward.1} parent=1 // pred_region
      %132 = dma.done [#allocation9], 16
    $region57: #{my_module_forward.1} parent=1 // pred_fallthru
      _
    // Predicated region
    $region58: #{my_module_forward.1} parent=1 // pred_check
      _
    $region59: #{my_module_forward.1} parent=1 // pred_check_branch
      %134 = sbr.rel (0) target = $region61
    $region60: #{my_module_forward.1} parent=1 // pred_region
      %135 = dma.done [#allocation12], 1024
    $region61: #{my_module_forward.1} parent=1 // pred_fallthru
      _
    // Predicated region
    $region62: #{my_module_forward.1} parent=1 // pred_check
      _
    $region63: #{my_module_forward.1} parent=1 // pred_check_branch
      %137 = sbr.rel (0) target = $region65
    $region64: #{my_module_forward.1} parent=1 // pred_region
      %138 = dma.done [#allocation12], 16
    $region65: #{my_module_forward.1} parent=1 // pred_fallthru
      _
    // Predicated region
    $region66: #{my_module_forward.1} parent=1 // pred_check
      _
    $region67: #{my_module_forward.1} parent=1 // pred_check_branch
      %140 = sbr.rel (0) target = $region69
    $region68: #{my_module_forward.1} parent=1 // pred_region
      %141 = dma.done [#allocation15], 512
    $region69: #{my_module_forward.1} parent=1 // pred_fallthru
      _
    // Predicated region
    $region70: #{my_module_forward.1} parent=1 // pred_check
      _
    $region71: #{my_module_forward.1} parent=1 // pred_check_branch
      %143 = sbr.rel (0) target = $region73
    $region72: #{my_module_forward.1} parent=1 // pred_region
      %144 = dma.done [#allocation15], 16
    $region73: #{my_module_forward.1} parent=1 // pred_fallthru
      _
    %v146 = vld [vmem:[#allocation2] sm:$0xff]
    %v147 = vld [vmem:[#allocation2 + $0x8] sm:$0xff]
    %v148 = vld [vmem:[#allocation2 + $0x10] sm:$0xff]
    %v149 = vld [vmem:[#allocation2 + $0x18] sm:$0xf]
    %v150 = vld [vmem:[#allocation5] sm:$0xff]
    %v151 = vld [vmem:[#allocation5 + $0x8] sm:$0xff]
    %v152 = vld [vmem:[#allocation5 + $0x10] sm:$0xff]
    %v153 = vld [vmem:[#allocation5 + $0x18] sm:$0xff]
    %v154 = vld [vmem:[#allocation5 + $0x20] sm:$0xff]
    %v155 = vld [vmem:[#allocation5 + $0x28] sm:$0xff]
    %v156 = vld [vmem:[#allocation5 + $0x30] sm:$0xff]
    %v157 = vld [vmem:[#allocation5 + $0x38] sm:$0xff]
    %v158 = vld [vmem:[#allocation5 + $0x40] sm:$0xff]
    %v159 = vld [vmem:[#allocation5 + $0x48] sm:$0xff]
    %v160 = vld [vmem:[#allocation5 + $0x50] sm:$0xff]
    %v161 = vld [vmem:[#allocation5 + $0x58] sm:$0xff]
    %v162 = vld [vmem:[#allocation5 + $0x60] sm:$0xff]
    %v163 = vld [vmem:[#allocation5 + $0x68] sm:$0xff]
    %v164 = vld [vmem:[#allocation5 + $0x70] sm:$0xff]
    %v165 = vld [vmem:[#allocation5 + $0x78] sm:$0xff]
    %v166 = vld [vmem:[#allocation5 + $0x80] sm:$0xff]
    %v167 = vld [vmem:[#allocation5 + $0x88] sm:$0xff]
    %v168 = vld [vmem:[#allocation5 + $0x90] sm:$0xff]
    %v169 = vld [vmem:[#allocation5 + $0x98] sm:$0xff]
    %v170 = vld [vmem:[#allocation5 + $0xa0] sm:$0xff]
    %v171 = vld [vmem:[#allocation5 + $0xa8] sm:$0xff]
    %v172 = vld [vmem:[#allocation5 + $0xb0] sm:$0xff]
    %v173 = vld [vmem:[#allocation5 + $0xb8] sm:$0xff]
    %v174 = vld [vmem:[#allocation5 + $0xc0] sm:$0xff]
    %v175 = vld [vmem:[#allocation5 + $0xc8] sm:$0xff]
    %v176 = vld [vmem:[#allocation5 + $0xd0] sm:$0xff]
    %v177 = vld [vmem:[#allocation5 + $0xd8] sm:$0xff]
    %v178 = vld [vmem:[#allocation5 + $0xe0] sm:$0xff]
    %v179 = vld [vmem:[#allocation5 + $0xe8] sm:$0xff]
    %v180 = vld [vmem:[#allocation5 + $0xf0] sm:$0xff]
    %v181 = vld [vmem:[#allocation5 + $0xf8] sm:$0xff]
    %v182 = vld [vmem:[#allocation5 + $0x100] sm:$0xff]
    %v183 = vld [vmem:[#allocation5 + $0x108] sm:$0xff]
    %v184 = vld [vmem:[#allocation5 + $0x110] sm:$0xff]
    %v185 = vld [vmem:[#allocation5 + $0x118] sm:$0xff]
    %v186 = vld [vmem:[#allocation5 + $0x120] sm:$0xff]
    %v187 = vld [vmem:[#allocation5 + $0x128] sm:$0xff]
    %v188 = vld [vmem:[#allocation5 + $0x130] sm:$0xff]
    %v189 = vld [vmem:[#allocation5 + $0x138] sm:$0xff]
    %v190 = vld [vmem:[#allocation5 + $0x140] sm:$0xff]
    %v191 = vld [vmem:[#allocation5 + $0x148] sm:$0xff]
    %v192 = vld [vmem:[#allocation5 + $0x150] sm:$0xff]
    %v193 = vld [vmem:[#allocation5 + $0x158] sm:$0xff]
    %v194 = vld [vmem:[#allocation5 + $0x160] sm:$0xff]
    %v195 = vld [vmem:[#allocation5 + $0x168] sm:$0xff]
    %v196 = vld [vmem:[#allocation5 + $0x170] sm:$0xff]
    %v197 = vld [vmem:[#allocation5 + $0x178] sm:$0xff]
    %v198 = vld [vmem:[#allocation5 + $0x180] sm:$0xff]
    %v199 = vld [vmem:[#allocation5 + $0x188] sm:$0xff]
    %v200 = vld [vmem:[#allocation5 + $0x190] sm:$0xff]
    %v201 = vld [vmem:[#allocation5 + $0x198] sm:$0xff]
    %v202 = vld [vmem:[#allocation5 + $0x1a0] sm:$0xff]
    %v203 = vld [vmem:[#allocation5 + $0x1a8] sm:$0xff]
    %v204 = vld [vmem:[#allocation5 + $0x1b0] sm:$0xff]
    %v205 = vld [vmem:[#allocation5 + $0x1b8] sm:$0xff]
    %v206 = vld [vmem:[#allocation5 + $0x1c0] sm:$0xff]
    %v207 = vld [vmem:[#allocation5 + $0x1c8] sm:$0xff]
    %v208 = vld [vmem:[#allocation5 + $0x1d0] sm:$0xff]
    %v209 = vld [vmem:[#allocation5 + $0x1d8] sm:$0xff]
    %v210 = vld [vmem:[#allocation5 + $0x1e0] sm:$0xff]
    %v211 = vld [vmem:[#allocation5 + $0x1e8] sm:$0xff]
    %v212 = vld [vmem:[#allocation5 + $0x1f0] sm:$0xff]
    %v213 = vld [vmem:[#allocation5 + $0x1f8] sm:$0xff]
    %v214 = vld [vmem:[#allocation5 + $0x200] sm:$0xff]
    %v215 = vld [vmem:[#allocation5 + $0x208] sm:$0xff]
    %v216 = vld [vmem:[#allocation5 + $0x210] sm:$0xff]
    %v217 = vld [vmem:[#allocation5 + $0x218] sm:$0xff]
    %v218 = vld [vmem:[#allocation5 + $0x220] sm:$0xff]
    %v219 = vld [vmem:[#allocation5 + $0x228] sm:$0xff]
    %v220 = vld [vmem:[#allocation5 + $0x230] sm:$0xff]
    %v221 = vld [vmem:[#allocation5 + $0x238] sm:$0xff]
    %v222 = vld [vmem:[#allocation5 + $0x240] sm:$0xff]
    %v223 = vld [vmem:[#allocation5 + $0x248] sm:$0xff]
    %v224 = vld [vmem:[#allocation5 + $0x250] sm:$0xff]
    %v225 = vld [vmem:[#allocation5 + $0x258] sm:$0xff]
    %v226 = vld [vmem:[#allocation5 + $0x260] sm:$0xff]
    %v227 = vld [vmem:[#allocation5 + $0x268] sm:$0xff]
    %v228 = vld [vmem:[#allocation5 + $0x270] sm:$0xff]
    %v229 = vld [vmem:[#allocation5 + $0x278] sm:$0xff]
    %v230 = vld [vmem:[#allocation5 + $0x280] sm:$0xff]
    %v231 = vld [vmem:[#allocation5 + $0x288] sm:$0xff]
    %v232 = vld [vmem:[#allocation5 + $0x290] sm:$0xff]
    %v233 = vld [vmem:[#allocation5 + $0x298] sm:$0xff]
    %v234 = vld [vmem:[#allocation5 + $0x2a0] sm:$0xff]
    %v235 = vld [vmem:[#allocation5 + $0x2a8] sm:$0xff]
    %v236 = vld [vmem:[#allocation5 + $0x2b0] sm:$0xff]
    %v237 = vld [vmem:[#allocation5 + $0x2b8] sm:$0xff]
    %v238 = vld [vmem:[#allocation5 + $0x2c0] sm:$0xff]
    %v239 = vld [vmem:[#allocation5 + $0x2c8] sm:$0xff]
    %v240 = vld [vmem:[#allocation5 + $0x2d0] sm:$0xff]
    %v241 = vld [vmem:[#allocation5 + $0x2d8] sm:$0xff]
    %v242 = vld [vmem:[#allocation5 + $0x2e0] sm:$0xff]
    %v243 = vld [vmem:[#allocation5 + $0x2e8] sm:$0xff]
    %v244 = vld [vmem:[#allocation5 + $0x2f0] sm:$0xff]
    %v245 = vld [vmem:[#allocation5 + $0x2f8] sm:$0xff]
    %v246 = vld [vmem:[#allocation5 + $0x300] sm:$0xff]
    %v247 = vld [vmem:[#allocation5 + $0x308] sm:$0xff]
    %v248 = vld [vmem:[#allocation5 + $0x310] sm:$0xff]
    %v249 = vld [vmem:[#allocation5 + $0x318] sm:$0xff]
    %v250 = vld [vmem:[#allocation5 + $0x320] sm:$0xff]
    %v251 = vld [vmem:[#allocation5 + $0x328] sm:$0xff]
    %v252 = vld [vmem:[#allocation5 + $0x330] sm:$0xff]
    %v253 = vld [vmem:[#allocation5 + $0x338] sm:$0xff]
    %v254 = vld [vmem:[#allocation5 + $0x340] sm:$0xff]
    %v255 = vld [vmem:[#allocation5 + $0x348] sm:$0xff]
    %v256 = vld [vmem:[#allocation5 + $0x350] sm:$0xff]
    %v257 = vld [vmem:[#allocation5 + $0x358] sm:$0xff]
    %v258 = vld [vmem:[#allocation5 + $0x360] sm:$0xff]
    %v259 = vld [vmem:[#allocation5 + $0x368] sm:$0xff]
    %v260 = vld [vmem:[#allocation5 + $0x370] sm:$0xff]
    %v261 = vld [vmem:[#allocation5 + $0x378] sm:$0xff]
    %v262 = vld [vmem:[#allocation7] sm:$0x3]
    %v264 = vlaneseq
    %v265 = vshrl.u32 %v264, 7
    %v266 = vsub.s32 0, %v265
    %v267 = vrot.slane %v262, %v266
    %v268 = vlaneseq
    %v269 = vshrl.u32 %v268, 7
    %v270 = vsub.s32 1, %v269
    %v271 = vrot.slane %v262, %v270
    %v278 = vunpack.c.l.b16 %v146
    %v279 = vunpack.c.h.b16 %v146
    %v280 = vunpack.c.l.b16 %v147
    %v281 = vunpack.c.h.b16 %v147
    %v282 = vunpack.c.l.b16 %v148
    %v283 = vunpack.c.h.b16 %v148
    %v284 = vunpack.c.l.b16 %v149
    %v285 = vpack.c.b16 %v278, %v278
    %v286 = vpack.c.b16 %v279, %v279
    %v287 = vpack.c.b16 %v280, %v280
    %v288 = vpack.c.b16 %v281, %v281
    %v289 = vpack.c.b16 %v282, %v282
    %v290 = vpack.c.b16 %v283, %v283
    %v291 = vpack.c.b16 %v284, %v284
    %v411 = vunpack.c.l.b16 %v150
    %v412 = vunpack.c.h.b16 %v150
    %v413 = vunpack.c.l.b16 %v151
    %v414 = vunpack.c.h.b16 %v151
    %v415 = vunpack.c.l.b16 %v152
    %v416 = vunpack.c.h.b16 %v152
    %v417 = vunpack.c.l.b16 %v153
    %v418 = vunpack.c.h.b16 %v153
    %v419 = vunpack.c.l.b16 %v154
    %v420 = vunpack.c.h.b16 %v154
    %v421 = vunpack.c.l.b16 %v155
    %v422 = vunpack.c.h.b16 %v155
    %v423 = vunpack.c.l.b16 %v156
    %v424 = vunpack.c.h.b16 %v156
    %v425 = vunpack.c.l.b16 %v157
    %v426 = vunpack.c.h.b16 %v157
    %v427 = vunpack.c.l.b16 %v158
    %v428 = vunpack.c.h.b16 %v158
    %v429 = vunpack.c.l.b16 %v159
    %v430 = vunpack.c.h.b16 %v159
    %v431 = vunpack.c.l.b16 %v160
    %v432 = vunpack.c.h.b16 %v160
    %v433 = vunpack.c.l.b16 %v161
    %v434 = vunpack.c.h.b16 %v161
    %v435 = vunpack.c.l.b16 %v162
    %v436 = vunpack.c.h.b16 %v162
    %v437 = vunpack.c.l.b16 %v163
    %v438 = vunpack.c.h.b16 %v163
    %v439 = vunpack.c.l.b16 %v164
    %v440 = vunpack.c.h.b16 %v164
    %v441 = vunpack.c.l.b16 %v165
    %v442 = vunpack.c.h.b16 %v165
    %v443 = vunpack.c.l.b16 %v166
    %v444 = vunpack.c.h.b16 %v166
    %v445 = vunpack.c.l.b16 %v167
    %v446 = vunpack.c.h.b16 %v167
    %v447 = vunpack.c.l.b16 %v168
    %v448 = vunpack.c.h.b16 %v168
    %v449 = vunpack.c.l.b16 %v169
    %v450 = vunpack.c.h.b16 %v169
    %v451 = vunpack.c.l.b16 %v170
    %v452 = vunpack.c.h.b16 %v170
    %v453 = vunpack.c.l.b16 %v171
    %v454 = vunpack.c.h.b16 %v171
    %v455 = vunpack.c.l.b16 %v172
    %v456 = vunpack.c.h.b16 %v172
    %v457 = vunpack.c.l.b16 %v173
    %v458 = vunpack.c.h.b16 %v173
    %v459 = vunpack.c.l.b16 %v174
    %v460 = vunpack.c.h.b16 %v174
    %v461 = vunpack.c.l.b16 %v175
    %v462 = vunpack.c.h.b16 %v175
    %v463 = vunpack.c.l.b16 %v176
    %v464 = vunpack.c.h.b16 %v176
    %v465 = vunpack.c.l.b16 %v177
    %v466 = vunpack.c.h.b16 %v177
    %v467 = vunpack.c.l.b16 %v178
    %v468 = vunpack.c.h.b16 %v178
    %v469 = vunpack.c.l.b16 %v179
    %v470 = vunpack.c.h.b16 %v179
    %v471 = vunpack.c.l.b16 %v180
    %v472 = vunpack.c.h.b16 %v180
    %v473 = vunpack.c.l.b16 %v181
    %v474 = vunpack.c.h.b16 %v181
    %v475 = vunpack.c.l.b16 %v182
    %v476 = vunpack.c.h.b16 %v182
    %v477 = vunpack.c.l.b16 %v183
    %v478 = vunpack.c.h.b16 %v183
    %v479 = vunpack.c.l.b16 %v184
    %v480 = vunpack.c.h.b16 %v184
    %v481 = vunpack.c.l.b16 %v185
    %v482 = vunpack.c.h.b16 %v185
    %v483 = vunpack.c.l.b16 %v186
    %v484 = vunpack.c.h.b16 %v186
    %v485 = vunpack.c.l.b16 %v187
    %v486 = vunpack.c.h.b16 %v187
    %v487 = vunpack.c.l.b16 %v188
    %v488 = vunpack.c.h.b16 %v188
    %v489 = vunpack.c.l.b16 %v189
    %v490 = vunpack.c.h.b16 %v189
    %v491 = vunpack.c.l.b16 %v190
    %v492 = vunpack.c.h.b16 %v190
    %v493 = vunpack.c.l.b16 %v191
    %v494 = vunpack.c.h.b16 %v191
    %v495 = vunpack.c.l.b16 %v192
    %v496 = vunpack.c.h.b16 %v192
    %v497 = vunpack.c.l.b16 %v193
    %v498 = vunpack.c.h.b16 %v193
    %v499 = vunpack.c.l.b16 %v194
    %v500 = vunpack.c.h.b16 %v194
    %v501 = vunpack.c.l.b16 %v195
    %v502 = vunpack.c.h.b16 %v195
    %v503 = vunpack.c.l.b16 %v196
    %v504 = vunpack.c.h.b16 %v196
    %v505 = vunpack.c.l.b16 %v197
    %v506 = vunpack.c.h.b16 %v197
    %v507 = vunpack.c.l.b16 %v198
    %v508 = vunpack.c.h.b16 %v198
    %v509 = vunpack.c.l.b16 %v199
    %v510 = vunpack.c.h.b16 %v199
    %v511 = vunpack.c.l.b16 %v200
    %v512 = vunpack.c.h.b16 %v200
    %v513 = vunpack.c.l.b16 %v201
    %v514 = vunpack.c.h.b16 %v201
    %v515 = vunpack.c.l.b16 %v202
    %v516 = vunpack.c.h.b16 %v202
    %v517 = vunpack.c.l.b16 %v203
    %v518 = vunpack.c.h.b16 %v203
    %v519 = vunpack.c.l.b16 %v204
    %v520 = vunpack.c.h.b16 %v204
    %v521 = vunpack.c.l.b16 %v205
    %v522 = vunpack.c.h.b16 %v205
    %v523 = vunpack.c.l.b16 %v206
    %v524 = vunpack.c.h.b16 %v206
    %v525 = vunpack.c.l.b16 %v207
    %v526 = vunpack.c.h.b16 %v207
    %v527 = vunpack.c.l.b16 %v208
    %v528 = vunpack.c.h.b16 %v208
    %v529 = vunpack.c.l.b16 %v209
    %v530 = vunpack.c.h.b16 %v209
    %v531 = vunpack.c.l.b16 %v210
    %v532 = vunpack.c.h.b16 %v210
    %v533 = vunpack.c.l.b16 %v211
    %v534 = vunpack.c.h.b16 %v211
    %v535 = vunpack.c.l.b16 %v212
    %v536 = vunpack.c.h.b16 %v212
    %v537 = vunpack.c.l.b16 %v213
    %v538 = vunpack.c.h.b16 %v213
    %v539 = vunpack.c.l.b16 %v214
    %v540 = vunpack.c.h.b16 %v214
    %v541 = vunpack.c.l.b16 %v215
    %v542 = vunpack.c.h.b16 %v215
    %v543 = vunpack.c.l.b16 %v216
    %v544 = vunpack.c.h.b16 %v216
    %v545 = vunpack.c.l.b16 %v217
    %v546 = vunpack.c.h.b16 %v217
    %v547 = vunpack.c.l.b16 %v218
    %v548 = vunpack.c.h.b16 %v218
    %v549 = vunpack.c.l.b16 %v219
    %v550 = vunpack.c.h.b16 %v219
    %v551 = vunpack.c.l.b16 %v220
    %v552 = vunpack.c.h.b16 %v220
    %v553 = vunpack.c.l.b16 %v221
    %v554 = vunpack.c.h.b16 %v221
    %v555 = vunpack.c.l.b16 %v222
    %v556 = vunpack.c.h.b16 %v222
    %v557 = vunpack.c.l.b16 %v223
    %v558 = vunpack.c.h.b16 %v223
    %v559 = vunpack.c.l.b16 %v224
    %v560 = vunpack.c.h.b16 %v224
    %v561 = vunpack.c.l.b16 %v225
    %v562 = vunpack.c.h.b16 %v225
    %v563 = vunpack.c.l.b16 %v226
    %v564 = vunpack.c.h.b16 %v226
    %v565 = vunpack.c.l.b16 %v227
    %v566 = vunpack.c.h.b16 %v227
    %v567 = vunpack.c.l.b16 %v228
    %v568 = vunpack.c.h.b16 %v228
    %v569 = vunpack.c.l.b16 %v229
    %v570 = vunpack.c.h.b16 %v229
    %v571 = vunpack.c.l.b16 %v230
    %v572 = vunpack.c.h.b16 %v230
    %v573 = vunpack.c.l.b16 %v231
    %v574 = vunpack.c.h.b16 %v231
    %v575 = vunpack.c.l.b16 %v232
    %v576 = vunpack.c.h.b16 %v232
    %v577 = vunpack.c.l.b16 %v233
    %v578 = vunpack.c.h.b16 %v233
    %v579 = vunpack.c.l.b16 %v234
    %v580 = vunpack.c.h.b16 %v234
    %v581 = vunpack.c.l.b16 %v235
    %v582 = vunpack.c.h.b16 %v235
    %v583 = vunpack.c.l.b16 %v236
    %v584 = vunpack.c.h.b16 %v236
    %v585 = vunpack.c.l.b16 %v237
    %v586 = vunpack.c.h.b16 %v237
    %v587 = vunpack.c.l.b16 %v238
    %v588 = vunpack.c.h.b16 %v238
    %v589 = vunpack.c.l.b16 %v239
    %v590 = vunpack.c.h.b16 %v239
    %v591 = vunpack.c.l.b16 %v240
    %v592 = vunpack.c.h.b16 %v240
    %v593 = vunpack.c.l.b16 %v241
    %v594 = vunpack.c.h.b16 %v241
    %v595 = vunpack.c.l.b16 %v242
    %v596 = vunpack.c.h.b16 %v242
    %v597 = vunpack.c.l.b16 %v243
    %v598 = vunpack.c.h.b16 %v243
    %v599 = vunpack.c.l.b16 %v244
    %v600 = vunpack.c.h.b16 %v244
    %v601 = vunpack.c.l.b16 %v245
    %v602 = vunpack.c.h.b16 %v245
    %v603 = vunpack.c.l.b16 %v246
    %v604 = vunpack.c.h.b16 %v246
    %v605 = vunpack.c.l.b16 %v247
    %v606 = vunpack.c.h.b16 %v247
    %v607 = vunpack.c.l.b16 %v248
    %v608 = vunpack.c.h.b16 %v248
    %v609 = vunpack.c.l.b16 %v249
    %v610 = vunpack.c.h.b16 %v249
    %v611 = vunpack.c.l.b16 %v250
    %v612 = vunpack.c.h.b16 %v250
    %v613 = vunpack.c.l.b16 %v251
    %v614 = vunpack.c.h.b16 %v251
    %v615 = vunpack.c.l.b16 %v252
    %v616 = vunpack.c.h.b16 %v252
    %v617 = vunpack.c.l.b16 %v253
    %v618 = vunpack.c.h.b16 %v253
    %v619 = vunpack.c.l.b16 %v254
    %v620 = vunpack.c.h.b16 %v254
    %v621 = vunpack.c.l.b16 %v255
    %v622 = vunpack.c.h.b16 %v255
    %v623 = vunpack.c.l.b16 %v256
    %v624 = vunpack.c.h.b16 %v256
    %v625 = vunpack.c.l.b16 %v257
    %v626 = vunpack.c.h.b16 %v257
    %v627 = vunpack.c.l.b16 %v258
    %v628 = vunpack.c.h.b16 %v258
    %v629 = vunpack.c.l.b16 %v259
    %v630 = vunpack.c.h.b16 %v259
    %v631 = vunpack.c.l.b16 %v260
    %v632 = vunpack.c.h.b16 %v260
    %v633 = vunpack.c.l.b16 %v261
    %v634 = vunpack.c.h.b16 %v261
    %v635 = vpack.c.b16 %v413, %v411
    %v636 = vpack.c.b16 %v414, %v412
    %v637 = vpack.c.b16 %v417, %v415
    %v638 = vpack.c.b16 %v418, %v416
    %v639 = vpack.c.b16 %v421, %v419
    %v640 = vpack.c.b16 %v422, %v420
    %v641 = vpack.c.b16 %v425, %v423
    %v642 = vpack.c.b16 %v426, %v424
    %v643 = vpack.c.b16 %v429, %v427
    %v644 = vpack.c.b16 %v430, %v428
    %v645 = vpack.c.b16 %v433, %v431
    %v646 = vpack.c.b16 %v434, %v432
    %v647 = vpack.c.b16 %v437, %v435
    %v648 = vpack.c.b16 %v438, %v436
    %v649 = vpack.c.b16 %v441, %v439
    %v650 = vpack.c.b16 %v442, %v440
    %v651 = vpack.c.b16 %v445, %v443
    %v652 = vpack.c.b16 %v446, %v444
    %v653 = vpack.c.b16 %v449, %v447
    %v654 = vpack.c.b16 %v450, %v448
    %v655 = vpack.c.b16 %v453, %v451
    %v656 = vpack.c.b16 %v454, %v452
    %v657 = vpack.c.b16 %v457, %v455
    %v658 = vpack.c.b16 %v458, %v456
    %v659 = vpack.c.b16 %v461, %v459
    %v660 = vpack.c.b16 %v462, %v460
    %v661 = vpack.c.b16 %v465, %v463
    %v662 = vpack.c.b16 %v466, %v464
    %v663 = vpack.c.b16 %v469, %v467
    %v664 = vpack.c.b16 %v470, %v468
    %v665 = vpack.c.b16 %v473, %v471
    %v666 = vpack.c.b16 %v474, %v472
    %v667 = vpack.c.b16 %v477, %v475
    %v668 = vpack.c.b16 %v478, %v476
    %v669 = vpack.c.b16 %v481, %v479
    %v670 = vpack.c.b16 %v482, %v480
    %v671 = vpack.c.b16 %v485, %v483
    %v672 = vpack.c.b16 %v486, %v484
    %v673 = vpack.c.b16 %v489, %v487
    %v674 = vpack.c.b16 %v490, %v488
    %v675 = vpack.c.b16 %v493, %v491
    %v676 = vpack.c.b16 %v494, %v492
    %v677 = vpack.c.b16 %v497, %v495
    %v678 = vpack.c.b16 %v498, %v496
    %v679 = vpack.c.b16 %v501, %v499
    %v680 = vpack.c.b16 %v502, %v500
    %v681 = vpack.c.b16 %v505, %v503
    %v682 = vpack.c.b16 %v506, %v504
    %v683 = vpack.c.b16 %v509, %v507
    %v684 = vpack.c.b16 %v510, %v508
    %v685 = vpack.c.b16 %v513, %v511
    %v686 = vpack.c.b16 %v514, %v512
    %v687 = vpack.c.b16 %v517, %v515
    %v688 = vpack.c.b16 %v518, %v516
    %v689 = vpack.c.b16 %v521, %v519
    %v690 = vpack.c.b16 %v522, %v520
    %v691 = vpack.c.b16 %v525, %v523
    %v692 = vpack.c.b16 %v526, %v524
    %v693 = vpack.c.b16 %v529, %v527
    %v694 = vpack.c.b16 %v530, %v528
    %v695 = vpack.c.b16 %v533, %v531
    %v696 = vpack.c.b16 %v534, %v532
    %v697 = vpack.c.b16 %v537, %v535
    %v698 = vpack.c.b16 %v538, %v536
    %v699 = vpack.c.b16 %v541, %v539
    %v700 = vpack.c.b16 %v542, %v540
    %v701 = vpack.c.b16 %v545, %v543
    %v702 = vpack.c.b16 %v546, %v544
    %v703 = vpack.c.b16 %v549, %v547
    %v704 = vpack.c.b16 %v550, %v548
    %v705 = vpack.c.b16 %v553, %v551
    %v706 = vpack.c.b16 %v554, %v552
    %v707 = vpack.c.b16 %v557, %v555
    %v708 = vpack.c.b16 %v558, %v556
    %v709 = vpack.c.b16 %v561, %v559
    %v710 = vpack.c.b16 %v562, %v560
    %v711 = vpack.c.b16 %v565, %v563
    %v712 = vpack.c.b16 %v566, %v564
    %v713 = vpack.c.b16 %v569, %v567
    %v714 = vpack.c.b16 %v570, %v568
    %v715 = vpack.c.b16 %v573, %v571
    %v716 = vpack.c.b16 %v574, %v572
    %v717 = vpack.c.b16 %v577, %v575
    %v718 = vpack.c.b16 %v578, %v576
    %v719 = vpack.c.b16 %v581, %v579
    %v720 = vpack.c.b16 %v582, %v580
    %v721 = vpack.c.b16 %v585, %v583
    %v722 = vpack.c.b16 %v586, %v584
    %v723 = vpack.c.b16 %v589, %v587
    %v724 = vpack.c.b16 %v590, %v588
    %v725 = vpack.c.b16 %v593, %v591
    %v726 = vpack.c.b16 %v594, %v592
    %v727 = vpack.c.b16 %v597, %v595
    %v728 = vpack.c.b16 %v598, %v596
    %v729 = vpack.c.b16 %v601, %v599
    %v730 = vpack.c.b16 %v602, %v600
    %v731 = vpack.c.b16 %v605, %v603
    %v732 = vpack.c.b16 %v606, %v604
    %v733 = vpack.c.b16 %v609, %v607
    %v734 = vpack.c.b16 %v610, %v608
    %v735 = vpack.c.b16 %v613, %v611
    %v736 = vpack.c.b16 %v614, %v612
    %v737 = vpack.c.b16 %v617, %v615
    %v738 = vpack.c.b16 %v618, %v616
    %v739 = vpack.c.b16 %v621, %v619
    %v740 = vpack.c.b16 %v622, %v620
    %v741 = vpack.c.b16 %v625, %v623
    %v742 = vpack.c.b16 %v626, %v624
    %v743 = vpack.c.b16 %v629, %v627
    %v744 = vpack.c.b16 %v630, %v628
    %v745 = vpack.c.b16 %v633, %v631
    %v746 = vpack.c.b16 %v634, %v632
    %859 = vmatprep.subr.bf16.mxu0 %v636
    %860 = vmatpush1.bf16.msra.mxu0 %v635
    %861 = vmatprep.subr.bf16.mxu0 %v638
    %862 = vmatpush1.bf16.msra.mxu0 %v637
    %863 = vmatprep.subr.bf16.mxu0 %v640
    %864 = vmatpush1.bf16.msra.mxu0 %v639
    %865 = vmatprep.subr.bf16.mxu0 %v642
    %866 = vmatpush1.bf16.msra.mxu0 %v641
    %867 = vmatprep.subr.bf16.mxu0 %v644
    %868 = vmatpush1.bf16.msra.mxu0 %v643
    %869 = vmatprep.subr.bf16.mxu0 %v646
    %870 = vmatpush1.bf16.msra.mxu0 %v645
    %871 = vmatprep.subr.bf16.mxu0 %v648
    %872 = vmatpush1.bf16.msra.mxu0 %v647
    %873 = vmatprep.subr.bf16.mxu0 %v650
    %874 = vmatpush1.bf16.msra.mxu0 %v649
    %875 = vmatprep.subr.bf16.mxu0 %v652
    %876 = vmatpush1.bf16.msra.mxu0 %v651
    %877 = vmatprep.subr.bf16.mxu0 %v654
    %878 = vmatpush1.bf16.msra.mxu0 %v653
    %879 = vmatprep.subr.bf16.mxu0 %v656
    %880 = vmatpush1.bf16.msra.mxu0 %v655
    %881 = vmatprep.subr.bf16.mxu0 %v658
    %882 = vmatpush1.bf16.msra.mxu0 %v657
    %883 = vmatprep.subr.bf16.mxu0 %v660
    %884 = vmatpush1.bf16.msra.mxu0 %v659
    %885 = vmatprep.subr.bf16.mxu0 %v662
    %886 = vmatpush1.bf16.msra.mxu0 %v661
    %887 = vmatprep.subr.bf16.mxu0 %v664
    %888 = vmatpush1.bf16.msra.mxu0 %v663
    %889 = vmatprep.subr.bf16.mxu0 %v666
    %890 = vmatpush1.bf16.msra.mxu0 %v665
    %891 = vmatprep.mubr.bf16.mxu0 %v286
    %892 = vmatmul.mubr.bf16.gmra.mrb[0].mxu0 %v285
    %v893 = vpop.f32.mrb[0].mxu0
    %v894 = vadd.f32 %v267, %v893
    %v895 = vpop.f32.mrb[0].mxu0
    %v896 = vadd.f32 %v271, %v895
    %v897 = vpop.f32.mrb[0].mxu0
    %v898 = vpop.f32.mrb[0].mxu0
    %899 = vdwg.mxu0
    %900 = vmatprep.subr.bf16.mxu0 %v668
    %901 = vmatpush1.bf16.msra.mxu0 %v667
    %902 = vmatprep.subr.bf16.mxu0 %v670
    %903 = vmatpush1.bf16.msra.mxu0 %v669
    %904 = vmatprep.subr.bf16.mxu0 %v672
    %905 = vmatpush1.bf16.msra.mxu0 %v671
    %906 = vmatprep.subr.bf16.mxu0 %v674
    %907 = vmatpush1.bf16.msra.mxu0 %v673
    %908 = vmatprep.subr.bf16.mxu0 %v676
    %909 = vmatpush1.bf16.msra.mxu0 %v675
    %910 = vmatprep.subr.bf16.mxu0 %v678
    %911 = vmatpush1.bf16.msra.mxu0 %v677
    %912 = vmatprep.subr.bf16.mxu0 %v680
    %913 = vmatpush1.bf16.msra.mxu0 %v679
    %914 = vmatprep.subr.bf16.mxu0 %v682
    %915 = vmatpush1.bf16.msra.mxu0 %v681
    %916 = vmatprep.subr.bf16.mxu0 %v684
    %917 = vmatpush1.bf16.msra.mxu0 %v683
    %918 = vmatprep.subr.bf16.mxu0 %v686
    %919 = vmatpush1.bf16.msra.mxu0 %v685
    %920 = vmatprep.subr.bf16.mxu0 %v688
    %921 = vmatpush1.bf16.msra.mxu0 %v687
    %922 = vmatprep.subr.bf16.mxu0 %v690
    %923 = vmatpush1.bf16.msra.mxu0 %v689
    %924 = vmatprep.subr.bf16.mxu0 %v692
    %925 = vmatpush1.bf16.msra.mxu0 %v691
    %926 = vmatprep.subr.bf16.mxu0 %v694
    %927 = vmatpush1.bf16.msra.mxu0 %v693
    %928 = vmatprep.subr.bf16.mxu0 %v696
    %929 = vmatpush1.bf16.msra.mxu0 %v695
    %930 = vmatprep.subr.bf16.mxu0 %v698
    %931 = vmatpush1.bf16.msra.mxu0 %v697
    %932 = vmatprep.mubr.bf16.mxu0 %v288
    %933 = vmatmul.mubr.bf16.gmra.mrb[0].mxu0 %v287
    %v934 = vpop.f32.mrb[0].mxu0
    %v935 = vadd.f32 %v894, %v934
    %v936 = vpop.f32.mrb[0].mxu0
    %v937 = vadd.f32 %v896, %v936
    %v938 = vpop.f32.mrb[0].mxu0
    %v939 = vpop.f32.mrb[0].mxu0
    %940 = vdwg.mxu0
    %941 = vmatprep.subr.bf16.mxu0 %v700
    %942 = vmatpush1.bf16.msra.mxu0 %v699
    %943 = vmatprep.subr.bf16.mxu0 %v702
    %944 = vmatpush1.bf16.msra.mxu0 %v701
    %945 = vmatprep.subr.bf16.mxu0 %v704
    %946 = vmatpush1.bf16.msra.mxu0 %v703
    %947 = vmatprep.subr.bf16.mxu0 %v706
    %948 = vmatpush1.bf16.msra.mxu0 %v705
    %949 = vmatprep.subr.bf16.mxu0 %v708
    %950 = vmatpush1.bf16.msra.mxu0 %v707
    %951 = vmatprep.subr.bf16.mxu0 %v710
    %952 = vmatpush1.bf16.msra.mxu0 %v709
    %953 = vmatprep.subr.bf16.mxu0 %v712
    %954 = vmatpush1.bf16.msra.mxu0 %v711
    %955 = vmatprep.subr.bf16.mxu0 %v714
    %956 = vmatpush1.bf16.msra.mxu0 %v713
    %957 = vmatprep.subr.bf16.mxu0 %v716
    %958 = vmatpush1.bf16.msra.mxu0 %v715
    %959 = vmatprep.subr.bf16.mxu0 %v718
    %960 = vmatpush1.bf16.msra.mxu0 %v717
    %961 = vmatprep.subr.bf16.mxu0 %v720
    %962 = vmatpush1.bf16.msra.mxu0 %v719
    %963 = vmatprep.subr.bf16.mxu0 %v722
    %964 = vmatpush1.bf16.msra.mxu0 %v721
    %965 = vmatprep.subr.bf16.mxu0 %v724
    %966 = vmatpush1.bf16.msra.mxu0 %v723
    %967 = vmatprep.subr.bf16.mxu0 %v726
    %968 = vmatpush1.bf16.msra.mxu0 %v725
    %969 = vmatprep.subr.bf16.mxu0 %v728
    %970 = vmatpush1.bf16.msra.mxu0 %v727
    %971 = vmatprep.subr.bf16.mxu0 %v730
    %972 = vmatpush1.bf16.msra.mxu0 %v729
    %973 = vmatprep.mubr.bf16.mxu0 %v290
    %974 = vmatmul.mubr.bf16.gmra.mrb[0].mxu0 %v289
    %v975 = vpop.f32.mrb[0].mxu0
    %v976 = vadd.f32 %v935, %v975
    %v977 = vpop.f32.mrb[0].mxu0
    %v978 = vadd.f32 %v937, %v977
    %v979 = vpop.f32.mrb[0].mxu0
    %v980 = vpop.f32.mrb[0].mxu0
    %981 = vdwg.mxu0
    %982 = vmatprep.subr.bf16.mxu0 %v732
    %983 = vmatpush1.bf16.msra.mxu0 %v731
    %984 = vmatprep.subr.bf16.mxu0 %v734
    %985 = vmatpush1.bf16.msra.mxu0 %v733
    %986 = vmatprep.subr.bf16.mxu0 %v736
    %987 = vmatpush1.bf16.msra.mxu0 %v735
    %988 = vmatprep.subr.bf16.mxu0 %v738
    %989 = vmatpush1.bf16.msra.mxu0 %v737
    %990 = vmatprep.subr.bf16.mxu0 %v740
    %991 = vmatpush1.bf16.msra.mxu0 %v739
    %992 = vmatprep.subr.bf16.mxu0 %v742
    %993 = vmatpush1.bf16.msra.mxu0 %v741
    %994 = vmatprep.subr.bf16.mxu0 %v744
    %995 = vmatpush1.bf16.msra.mxu0 %v743
    %996 = vmatprep.subr.bf16.mxu0 %v746
    %997 = vmatpush1.bf16.msra.mxu0 %v745
    %998 = vmatprep.subr.bf16.mxu0 0
    %999 = vmatpush1.bf16.msra.mxu0 0
    %1000 = vmatprep.subr.bf16.mxu0 0
    %1001 = vmatpush1.bf16.msra.mxu0 0
    %1002 = vmatprep.subr.bf16.mxu0 0
    %1003 = vmatpush1.bf16.msra.mxu0 0
    %1004 = vmatprep.subr.bf16.mxu0 0
    %1005 = vmatpush1.bf16.msra.mxu0 0
    %1006 = vmatprep.subr.bf16.mxu0 0
    %1007 = vmatpush1.bf16.msra.mxu0 0
    %1008 = vmatprep.subr.bf16.mxu0 0
    %1009 = vmatpush1.bf16.msra.mxu0 0
    %1010 = vmatprep.subr.bf16.mxu0 0
    %1011 = vmatpush1.bf16.msra.mxu0 0
    %1012 = vmatprep.subr.bf16.mxu0 0
    %1013 = vmatpush1.bf16.msra.mxu0 0
    %1014 = vmatprep.mubr.bf16.mxu0 0
    %1015 = vmatmul.mubr.bf16.gmra.mrb[0].mxu0 %v291
    %v1016 = vpop.f32.mrb[0].mxu0
    %v1017 = vadd.f32 %v976, %v1016
    %v1018 = vpop.f32.mrb[0].mxu0
    %v1019 = vadd.f32 %v978, %v1018
    %v1020 = vpop.f32.mrb[0].mxu0
    %v1021 = vpop.f32.mrb[0].mxu0
    %1022 = vdwg.mxu0
    %v1023 = vmax.f32 %v1017, 0.0
    %v1024 = vmax.f32 %v1019, 0.0
    %v1025 = vpack.c.bf16 %v1023, %v1023
    %v1026 = vpack.c.bf16 %v1024, %v1024
    %v1027 = vld [vmem:[#allocation8] sm:$0xf]
    %v1028 = vld [vmem:[#allocation8 + $0x4] sm:$0xf]
    %v1029 = vld [vmem:[#allocation8 + $0x8] sm:$0xf]
    %v1030 = vld [vmem:[#allocation8 + $0xc] sm:$0xf]
    %v1031 = vld [vmem:[#allocation8 + $0x10] sm:$0xf]
    %v1032 = vld [vmem:[#allocation8 + $0x14] sm:$0xf]
    %v1033 = vld [vmem:[#allocation8 + $0x18] sm:$0xf]
    %v1034 = vld [vmem:[#allocation8 + $0x1c] sm:$0xf]
    %v1035 = vld [vmem:[#allocation8 + $0x20] sm:$0xf]
    %v1036 = vld [vmem:[#allocation8 + $0x24] sm:$0xf]
    %v1037 = vld [vmem:[#allocation8 + $0x28] sm:$0xf]
    %v1038 = vld [vmem:[#allocation8 + $0x2c] sm:$0xf]
    %v1039 = vld [vmem:[#allocation8 + $0x30] sm:$0xf]
    %v1040 = vld [vmem:[#allocation8 + $0x34] sm:$0xf]
    %v1041 = vld [vmem:[#allocation8 + $0x38] sm:$0xf]
    %v1042 = vld [vmem:[#allocation8 + $0x3c] sm:$0xf]
    %v1043 = vld [vmem:[#allocation8 + $0x40] sm:$0xf]
    %v1044 = vld [vmem:[#allocation8 + $0x44] sm:$0xf]
    %v1045 = vld [vmem:[#allocation8 + $0x48] sm:$0xf]
    %v1046 = vld [vmem:[#allocation8 + $0x4c] sm:$0xf]
    %v1047 = vld [vmem:[#allocation8 + $0x50] sm:$0xf]
    %v1048 = vld [vmem:[#allocation8 + $0x54] sm:$0xf]
    %v1049 = vld [vmem:[#allocation8 + $0x58] sm:$0xf]
    %v1050 = vld [vmem:[#allocation8 + $0x5c] sm:$0xf]
    %v1051 = vld [vmem:[#allocation8 + $0x60] sm:$0xf]
    %v1052 = vld [vmem:[#allocation8 + $0x64] sm:$0xf]
    %v1053 = vld [vmem:[#allocation8 + $0x68] sm:$0xf]
    %v1054 = vld [vmem:[#allocation8 + $0x6c] sm:$0xf]
    %v1055 = vld [vmem:[#allocation8 + $0x70] sm:$0xf]
    %v1056 = vld [vmem:[#allocation8 + $0x74] sm:$0xf]
    %v1057 = vld [vmem:[#allocation8 + $0x78] sm:$0xf]
    %v1058 = vld [vmem:[#allocation8 + $0x7c] sm:$0xf]
    %v1059 = vld [vmem:[#allocation10] sm:$0x1]
    %v1061 = vlaneseq
    %v1062 = vshrl.u32 %v1061, 7
    %v1063 = vsub.s32 0, %v1062
    %v1064 = vrot.slane %v1059, %v1063
    %v1098 = vunpack.c.l.b16 %v1027
    %v1099 = vunpack.c.l.b16 %v1028
    %v1100 = vunpack.c.l.b16 %v1029
    %v1101 = vunpack.c.l.b16 %v1030
    %v1102 = vunpack.c.l.b16 %v1031
    %v1103 = vunpack.c.l.b16 %v1032
    %v1104 = vunpack.c.l.b16 %v1033
    %v1105 = vunpack.c.l.b16 %v1034
    %v1106 = vunpack.c.l.b16 %v1035
    %v1107 = vunpack.c.l.b16 %v1036
    %v1108 = vunpack.c.l.b16 %v1037
    %v1109 = vunpack.c.l.b16 %v1038
    %v1110 = vunpack.c.l.b16 %v1039
    %v1111 = vunpack.c.l.b16 %v1040
    %v1112 = vunpack.c.l.b16 %v1041
    %v1113 = vunpack.c.l.b16 %v1042
    %v1114 = vunpack.c.l.b16 %v1043
    %v1115 = vunpack.c.l.b16 %v1044
    %v1116 = vunpack.c.l.b16 %v1045
    %v1117 = vunpack.c.l.b16 %v1046
    %v1118 = vunpack.c.l.b16 %v1047
    %v1119 = vunpack.c.l.b16 %v1048
    %v1120 = vunpack.c.l.b16 %v1049
    %v1121 = vunpack.c.l.b16 %v1050
    %v1122 = vunpack.c.l.b16 %v1051
    %v1123 = vunpack.c.l.b16 %v1052
    %v1124 = vunpack.c.l.b16 %v1053
    %v1125 = vunpack.c.l.b16 %v1054
    %v1126 = vunpack.c.l.b16 %v1055
    %v1127 = vunpack.c.l.b16 %v1056
    %v1128 = vunpack.c.l.b16 %v1057
    %v1129 = vunpack.c.l.b16 %v1058
    %v1130 = vpack.c.b16 %v1099, %v1098
    %v1131 = vpack.c.b16 %v1101, %v1100
    %v1132 = vpack.c.b16 %v1103, %v1102
    %v1133 = vpack.c.b16 %v1105, %v1104
    %v1134 = vpack.c.b16 %v1107, %v1106
    %v1135 = vpack.c.b16 %v1109, %v1108
    %v1136 = vpack.c.b16 %v1111, %v1110
    %v1137 = vpack.c.b16 %v1113, %v1112
    %v1138 = vpack.c.b16 %v1115, %v1114
    %v1139 = vpack.c.b16 %v1117, %v1116
    %v1140 = vpack.c.b16 %v1119, %v1118
    %v1141 = vpack.c.b16 %v1121, %v1120
    %v1142 = vpack.c.b16 %v1123, %v1122
    %v1143 = vpack.c.b16 %v1125, %v1124
    %v1144 = vpack.c.b16 %v1127, %v1126
    %v1145 = vpack.c.b16 %v1129, %v1128
    %1162 = vmatprep.subr.bf16.mxu0 0
    %1163 = vmatpush1.bf16.msra.mxu0 %v1130
    %1164 = vmatprep.subr.bf16.mxu0 0
    %1165 = vmatpush1.bf16.msra.mxu0 %v1131
    %1166 = vmatprep.subr.bf16.mxu0 0
    %1167 = vmatpush1.bf16.msra.mxu0 %v1132
    %1168 = vmatprep.subr.bf16.mxu0 0
    %1169 = vmatpush1.bf16.msra.mxu0 %v1133
    %1170 = vmatprep.subr.bf16.mxu0 0
    %1171 = vmatpush1.bf16.msra.mxu0 %v1134
    %1172 = vmatprep.subr.bf16.mxu0 0
    %1173 = vmatpush1.bf16.msra.mxu0 %v1135
    %1174 = vmatprep.subr.bf16.mxu0 0
    %1175 = vmatpush1.bf16.msra.mxu0 %v1136
    %1176 = vmatprep.subr.bf16.mxu0 0
    %1177 = vmatpush1.bf16.msra.mxu0 %v1137
    %1178 = vmatprep.subr.bf16.mxu0 0
    %1179 = vmatpush1.bf16.msra.mxu0 %v1138
    %1180 = vmatprep.subr.bf16.mxu0 0
    %1181 = vmatpush1.bf16.msra.mxu0 %v1139
    %1182 = vmatprep.subr.bf16.mxu0 0
    %1183 = vmatpush1.bf16.msra.mxu0 %v1140
    %1184 = vmatprep.subr.bf16.mxu0 0
    %1185 = vmatpush1.bf16.msra.mxu0 %v1141
    %1186 = vmatprep.subr.bf16.mxu0 0
    %1187 = vmatpush1.bf16.msra.mxu0 %v1142
    %1188 = vmatprep.subr.bf16.mxu0 0
    %1189 = vmatpush1.bf16.msra.mxu0 %v1143
    %1190 = vmatprep.subr.bf16.mxu0 0
    %1191 = vmatpush1.bf16.msra.mxu0 %v1144
    %1192 = vmatprep.subr.bf16.mxu0 0
    %1193 = vmatpush1.bf16.msra.mxu0 %v1145
    %1194 = vmatprep.mubr.bf16.mxu0 %v1026
    %1195 = vmatmul.mubr.bf16.gmra.mrb[0].mxu0 %v1025
    %v1196 = vpop.f32.mrb[0].mxu0
    %v1197 = vadd.f32 %v1064, %v1196
    %v1198 = vpop.f32.mrb[0].mxu0
    %v1199 = vpop.f32.mrb[0].mxu0
    %v1200 = vpop.f32.mrb[0].mxu0
    %1201 = vdwg.mxu0
    %v1202 = vmax.f32 %v1197, 0.0
    %v1203 = vpack.c.bf16 %v1202, %v1202
    %v1204 = vld [vmem:[#allocation11] sm:$0xf]
    %v1205 = vld [vmem:[#allocation11 + $0x4] sm:$0xf]
    %v1206 = vld [vmem:[#allocation11 + $0x8] sm:$0xf]
    %v1207 = vld [vmem:[#allocation11 + $0xc] sm:$0xf]
    %v1208 = vld [vmem:[#allocation11 + $0x10] sm:$0xf]
    %v1209 = vld [vmem:[#allocation11 + $0x14] sm:$0xf]
    %v1210 = vld [vmem:[#allocation11 + $0x18] sm:$0xf]
    %v1211 = vld [vmem:[#allocation11 + $0x1c] sm:$0xf]
    %v1212 = vld [vmem:[#allocation11 + $0x20] sm:$0xf]
    %v1213 = vld [vmem:[#allocation11 + $0x24] sm:$0xf]
    %v1214 = vld [vmem:[#allocation11 + $0x28] sm:$0xf]
    %v1215 = vld [vmem:[#allocation11 + $0x2c] sm:$0xf]
    %v1216 = vld [vmem:[#allocation11 + $0x30] sm:$0xf]
    %v1217 = vld [vmem:[#allocation11 + $0x34] sm:$0xf]
    %v1218 = vld [vmem:[#allocation11 + $0x38] sm:$0xf]
    %v1219 = vld [vmem:[#allocation11 + $0x3c] sm:$0xf]
    %v1220 = vld [vmem:[#allocation13] sm:$0x1]
    %v1222 = vlaneseq
    %v1223 = vshrl.u32 %v1222, 7
    %v1224 = vsub.s32 0, %v1223
    %v1225 = vrot.slane %v1220, %v1224
    %v1243 = vunpack.c.l.b16 %v1204
    %v1244 = vunpack.c.l.b16 %v1205
    %v1245 = vunpack.c.l.b16 %v1206
    %v1246 = vunpack.c.l.b16 %v1207
    %v1247 = vunpack.c.l.b16 %v1208
    %v1248 = vunpack.c.l.b16 %v1209
    %v1249 = vunpack.c.l.b16 %v1210
    %v1250 = vunpack.c.l.b16 %v1211
    %v1251 = vunpack.c.l.b16 %v1212
    %v1252 = vunpack.c.l.b16 %v1213
    %v1253 = vunpack.c.l.b16 %v1214
    %v1254 = vunpack.c.l.b16 %v1215
    %v1255 = vunpack.c.l.b16 %v1216
    %v1256 = vunpack.c.l.b16 %v1217
    %v1257 = vunpack.c.l.b16 %v1218
    %v1258 = vunpack.c.l.b16 %v1219
    %v1259 = vpack.c.b16 %v1244, %v1243
    %v1260 = vpack.c.b16 %v1246, %v1245
    %v1261 = vpack.c.b16 %v1248, %v1247
    %v1262 = vpack.c.b16 %v1250, %v1249
    %v1263 = vpack.c.b16 %v1252, %v1251
    %v1264 = vpack.c.b16 %v1254, %v1253
    %v1265 = vpack.c.b16 %v1256, %v1255
    %v1266 = vpack.c.b16 %v1258, %v1257
    %1275 = vmatprep.subr.bf16.mxu0 0
    %1276 = vmatpush1.bf16.msra.mxu0 %v1259
    %1277 = vmatprep.subr.bf16.mxu0 0
    %1278 = vmatpush1.bf16.msra.mxu0 %v1260
    %1279 = vmatprep.subr.bf16.mxu0 0
    %1280 = vmatpush1.bf16.msra.mxu0 %v1261
    %1281 = vmatprep.subr.bf16.mxu0 0
    %1282 = vmatpush1.bf16.msra.mxu0 %v1262
    %1283 = vmatprep.subr.bf16.mxu0 0
    %1284 = vmatpush1.bf16.msra.mxu0 %v1263
    %1285 = vmatprep.subr.bf16.mxu0 0
    %1286 = vmatpush1.bf16.msra.mxu0 %v1264
    %1287 = vmatprep.subr.bf16.mxu0 0
    %1288 = vmatpush1.bf16.msra.mxu0 %v1265
    %1289 = vmatprep.subr.bf16.mxu0 0
    %1290 = vmatpush1.bf16.msra.mxu0 %v1266
    %1291 = vmatprep.subr.bf16.mxu0 0
    %1292 = vmatpush1.bf16.msra.mxu0 0
    %1293 = vmatprep.subr.bf16.mxu0 0
    %1294 = vmatpush1.bf16.msra.mxu0 0
    %1295 = vmatprep.subr.bf16.mxu0 0
    %1296 = vmatpush1.bf16.msra.mxu0 0
    %1297 = vmatprep.subr.bf16.mxu0 0
    %1298 = vmatpush1.bf16.msra.mxu0 0
    %1299 = vmatprep.subr.bf16.mxu0 0
    %1300 = vmatpush1.bf16.msra.mxu0 0
    %1301 = vmatprep.subr.bf16.mxu0 0
    %1302 = vmatpush1.bf16.msra.mxu0 0
    %1303 = vmatprep.subr.bf16.mxu0 0
    %1304 = vmatpush1.bf16.msra.mxu0 0
    %1305 = vmatprep.subr.bf16.mxu0 0
    %1306 = vmatpush1.bf16.msra.mxu0 0
    %1307 = vmatprep.mubr.bf16.mxu0 0
    %1308 = vmatmul.mubr.bf16.gmra.mrb[0].mxu0 %v1203
    %v1309 = vpop.f32.mrb[0].mxu0
    %v1310 = vadd.f32 %v1225, %v1309
    %v1311 = vpop.f32.mrb[0].mxu0
    %v1312 = vpop.f32.mrb[0].mxu0
    %v1313 = vpop.f32.mrb[0].mxu0
    %1314 = vdwg.mxu0
    %v1315 = vmax.f32 %v1310, 0.0
    %v1316 = vpack.c.bf16 %v1315, %v1315
    %v1317 = vld [vmem:[#allocation14] sm:$0xf]
    %v1318 = vld [vmem:[#allocation14 + $0x4] sm:$0xf]
    %v1319 = vld [vmem:[#allocation14 + $0x8] sm:$0xf]
    %v1320 = vld [vmem:[#allocation14 + $0xc] sm:$0xf]
    %v1321 = vld [vmem:[#allocation14 + $0x10] sm:$0xf]
    %v1322 = vld [vmem:[#allocation14 + $0x14] sm:$0xf]
    %v1323 = vld [vmem:[#allocation14 + $0x18] sm:$0xf]
    %v1324 = vld [vmem:[#allocation14 + $0x1c] sm:$0xf]
    %v1325 = vld [vmem:[#allocation16] sm:$0x1]
    %v1327 = vlaneseq
    %v1328 = vshrl.u32 %v1327, 7
    %v1329 = vsub.s32 0, %v1328
    %v1330 = vrot.slane %v1325, %v1329
    %v1340 = vunpack.c.l.b16 %v1317
    %v1341 = vunpack.c.l.b16 %v1318
    %v1342 = vunpack.c.l.b16 %v1319
    %v1343 = vunpack.c.l.b16 %v1320
    %v1344 = vunpack.c.l.b16 %v1321
    %v1345 = vunpack.c.l.b16 %v1322
    %v1346 = vunpack.c.l.b16 %v1323
    %v1347 = vunpack.c.l.b16 %v1324
    %v1348 = vpack.c.b16 %v1341, %v1340
    %v1349 = vpack.c.b16 %v1343, %v1342
    %v1350 = vpack.c.b16 %v1345, %v1344
    %v1351 = vpack.c.b16 %v1347, %v1346
    %vm1356 = vcmask 523264
    %v1358 = vsel %vm1356, %v1316, 0
    %1360 = vmatprep.subr.bf16.mxu0 0
    %1361 = vmatpush1.bf16.msra.mxu0 %v1348
    %1362 = vmatprep.subr.bf16.mxu0 0
    %1363 = vmatpush1.bf16.msra.mxu0 %v1349
    %1364 = vmatprep.subr.bf16.mxu0 0
    %1365 = vmatpush1.bf16.msra.mxu0 %v1350
    %1366 = vmatprep.subr.bf16.mxu0 0
    %1367 = vmatpush1.bf16.msra.mxu0 %v1351
    %1368 = vmatprep.subr.bf16.mxu0 0
    %1369 = vmatpush1.bf16.msra.mxu0 0
    %1370 = vmatprep.subr.bf16.mxu0 0
    %1371 = vmatpush1.bf16.msra.mxu0 0
    %1372 = vmatprep.subr.bf16.mxu0 0
    %1373 = vmatpush1.bf16.msra.mxu0 0
    %1374 = vmatprep.subr.bf16.mxu0 0
    %1375 = vmatpush1.bf16.msra.mxu0 0
    %1376 = vmatprep.subr.bf16.mxu0 0
    %1377 = vmatpush1.bf16.msra.mxu0 0
    %1378 = vmatprep.subr.bf16.mxu0 0
    %1379 = vmatpush1.bf16.msra.mxu0 0
    %1380 = vmatprep.subr.bf16.mxu0 0
    %1381 = vmatpush1.bf16.msra.mxu0 0
    %1382 = vmatprep.subr.bf16.mxu0 0
    %1383 = vmatpush1.bf16.msra.mxu0 0
    %1384 = vmatprep.subr.bf16.mxu0 0
    %1385 = vmatpush1.bf16.msra.mxu0 0
    %1386 = vmatprep.subr.bf16.mxu0 0
    %1387 = vmatpush1.bf16.msra.mxu0 0
    %1388 = vmatprep.subr.bf16.mxu0 0
    %1389 = vmatpush1.bf16.msra.mxu0 0
    %1390 = vmatprep.subr.bf16.mxu0 0
    %1391 = vmatpush1.bf16.msra.mxu0 0
    %1392 = vmatprep.mubr.bf16.mxu0 0
    %1393 = vmatmul.mubr.bf16.gmra.mrb[0].mxu0 %v1358
    %v1394 = vpop.f32.mrb[0].mxu0
    %v1395 = vadd.f32 %v1330, %v1394
    %v1396 = vpop.f32.mrb[0].mxu0
    %v1397 = vpop.f32.mrb[0].mxu0
    %v1398 = vpop.f32.mrb[0].mxu0
    %1399 = vdwg.mxu0
    %1400 = vmax.xlane.f32.xlu0 %v1395
    %v1401 = vpop.xlane.xlu0 %1400
    %v1402 = vsub.f32 %v1395, %v1401
    %v1403 = vmul.f32 %v1402, 1.442695
    %v1404 = vpow.pop %v1403
    %1405 = vadd.xlane.f32.xlu0 %v1404
    %v1406 = vpop.xlane.xlu0 %1405
    %v1407 = vrcp.pop %v1406
    %v1408 = vmul.f32 %v1404, %v1407
    %1409 = vst [vmem:[#allocation17] sm:$0xff] %v1408
    // Predicated region
    $region74: #{my_module_forward.1} parent=1 // pred_check
      _
    $region75: #{my_module_forward.1} parent=1 // pred_check_branch
      %1411 = sbr.rel (0) target = $region77
    $region76: #{my_module_forward.1} parent=1 // pred_region
      %s1413 = ssub.s32 128, 128
      %1414 = vsyncadd [#allocation4], %s1413
      %s1416 = sshll.u32 [#allocation17], 4
      %s1417 = int_to_ptr.vmem [resolvable:$true] %s1416
      %1419 = dma.vmem_to_hbm [thread:$0]  %s1417, 128, %s9, [#allocation4]
    $region77: #{my_module_forward.1} parent=1 // pred_fallthru
      _
    // Predicated region
    $region78: #{my_module_forward.1} parent=1 // pred_check
      _
    $region79: #{my_module_forward.1} parent=1 // pred_check_branch
      %1421 = sbr.rel (0) target = $region81
    $region80: #{my_module_forward.1} parent=1 // pred_region
      %1422 = dma.done [#allocation4], 128
    $region81: #{my_module_forward.1} parent=1 // pred_fallthru
      _
    %1423 = vsyncpa [#allocation3], 1
    %1424 = vsyncpa [#allocation6], 1
    %1425 = vsyncpa [#allocation9], 1
    %1426 = vsyncpa [#allocation12], 1
    %1427 = vsyncpa [#allocation15], 1
    %1428 = vsyncpa [#allocation4], 1

</llo_original>
